<compile_context>
chip_gen: v5e
topology: v5e:2x2
jax: 0.10.0
libtpu: 0.0.40
codegen_flags: <defaults>
</compile_context>

<pallas_src>
import jax
import jax.numpy as jnp
from jax.experimental import pallas as pl
from jax.experimental.pallas import tpu as pltpu


def _chomp_copy_kernel(x_ref, o_ref):
    # Lane-tiled path: input block already excludes (most of) the chomped tail;
    # the partial final lane/row blocks are handled by Pallas's masked edge writes.
    o_ref[...] = x_ref[...]


def _chomp_slice_kernel(x_ref, o_ref):
    # Single-lane-block path: input block carries a few extra (<128 rounded-up,
    # or the short tail) lanes; crop them with a static in-VMEM slice.
    l_out = o_ref.shape[-1]
    o_ref[...] = x_ref[:, :l_out]


def _round_up(x: int, m: int) -> int:
    return ((x + m - 1) // m) * m


def chomp1d(x: jax.Array, chomp_size: int, *, block_bytes: int = 4 * 1024 * 1024) -> jax.Array:
    """Crop the rightmost `chomp_size` elements along axis 2 of (N, C, L)."""
    n, c, l = x.shape
    assert chomp_size >= 0
    l_out = l - chomp_size
    assert l_out > 0, "chomp_size must be smaller than the sequence length"

    if chomp_size == 0:
        # torch.narrow(..., length=L).contiguous() on a contiguous tensor is the
        # identity (same storage); mirror that by returning x unchanged.
        return x

    # Flatten to a 2D row view: rows are (batch, channel) pairs, lanes are L.
    r = n * c
    x2 = x.reshape(r, l)

    itemsize = jnp.dtype(x.dtype).itemsize
    # Rows per vreg (sublane packing): 8 for 32-bit, 16 for bf16, 32 for int8.
    sublane = max(8, 32 // max(1, itemsize))

    # ---- Lane (L) tiling ----------------------------------------------------
    lane_full = _round_up(l_out, 128)                       # max useful lanes to read
    max_tl = max(128, (block_bytes // (sublane * itemsize)) // 128 * 128)
    tl = min(lane_full, max_tl)                              # lane tile, 128-multiple
    lane_blocks = pl.cdiv(l_out, tl)

    if lane_blocks == 1:
        # One lane block covers the whole output row.  Output block = full l_out
        # (lane-dense, exact); input block reads round_up(l_out, 128) lanes, or
        # the full row when that is already within 128 lanes of l_out.
        in_l = l if lane_full >= l else tl
        out_l = l_out
        kernel = _chomp_slice_kernel
    else:
        # Tile the lane axis in 128-multiples: long sequences neither blow VMEM
        # nor pay bandwidth for the chomped tail.  The last (partial) lane block
        # is masked on store by Pallas.
        in_l = out_l = tl
        kernel = _chomp_copy_kernel

    # ---- Row (N*C) tiling ----------------------------------------------------
    rows_budget = max(1, block_bytes // (in_l * itemsize))
    if rows_budget >= r:
        rows = r                                             # full extent: always legal
    else:
        rows = min(r, max(sublane, (rows_budget // sublane) * sublane))

    # v7x dual-TensorCore balance: with "parallel" semantics the grid is sharded
    # across both TCs; make sure there are enough steps to share when possible.
    min_steps = 8
    row_blocks = pl.cdiv(r, rows)
    if row_blocks * lane_blocks < min_steps and rows > sublane:
        want_row_blocks = min(pl.cdiv(r, sublane), pl.cdiv(min_steps, lane_blocks))
        rows = min(r, max(sublane, _round_up(pl.cdiv(r, want_row_blocks), sublane)))
        row_blocks = pl.cdiv(r, rows)

    grid = (row_blocks, lane_blocks)

    out2 = pl.pallas_call(
        kernel,
        out_shape=jax.ShapeDtypeStruct((r, l_out), x.dtype),
        grid=grid,
        in_specs=[pl.BlockSpec((rows, in_l), lambda i, j: (i, j))],
        out_specs=pl.BlockSpec((rows, out_l), lambda i, j: (i, j)),
        compiler_params=pltpu.CompilerParams(
            dimension_semantics=("parallel", "parallel"),
            vmem_limit_bytes=32 * 1024 * 1024,
        ),
    )(x2)

    return out2.reshape(n, c, l_out)


if __name__ == "__main__":
    key = jax.random.PRNGKey(0)

    # Test 1: tiny shape (single-block, full-row-read slice path).
    N, C, L = 2, 4, 16
    chomp_size = 3  # e.g. (kernel_size - 1) * dilation padding of a causal conv
    x = jax.random.normal(key, (N, C, L), dtype=jnp.float32)
    out = jax.block_until_ready(chomp1d(x, chomp_size))
    ref = x[:, :, : L - chomp_size]
    assert out.shape == (N, C, L - chomp_size), out.shape
    assert out.dtype == x.dtype
    assert jnp.array_equal(out, ref), "mismatch vs reference crop (test 1)"

    # Test 2: rounded-up 128-lane reads that skip most of the chomped tail,
    # plus the >=2-step row split for dual-TensorCore balance.
    N2, C2, L2, chomp2 = 2, 8, 640, 256
    x2 = jax.random.normal(jax.random.PRNGKey(1), (N2, C2, L2), dtype=jnp.float32)
    out2 = jax.block_until_ready(chomp1d(x2, chomp2))
    assert jnp.array_equal(out2, x2[:, :, : L2 - chomp2]), "mismatch (test 2)"

    # Test 3: multi-lane-block copy path with a partial (masked) final block
    # (small block_bytes forces lane tiling at a small shape).
    N3, C3, L3, chomp3 = 2, 8, 1024, 124
    x3 = jax.random.normal(jax.random.PRNGKey(2), (N3, C3, L3), dtype=jnp.float32)
    out3 = jax.block_until_ready(chomp1d(x3, chomp3, block_bytes=16 * 1024))
    assert jnp.array_equal(out3, x3[:, :, : L3 - chomp3]), "mismatch (test 3)"

    print("KERNEL_OK")
</pallas_src>

<mosaic_0001>
module attributes {stable_mosaic.version = 11 : i64} {
  func.func @_chomp_slice_kernel(%arg0: i32, %arg1: i32, %arg2: memref<8x16xf32, #tpu.memory_space<vmem>>, %arg3: memref<8x13xf32, #tpu.memory_space<vmem>>) attributes {dimension_semantics = [#tpu.dimension_semantics<parallel>, #tpu.dimension_semantics<parallel>], iteration_bounds = array<i64: 1, 1>, scalar_prefetch = 0 : i64, scratch_operands = 0 : i64, tpu.core_type = #tpu.core_type<tc>, window_params = [{transform_indices = @transform_0, window_bounds = array<i64: 8, 16>}, {transform_indices = @transform_1, window_bounds = array<i64: 8, 13>}]} {
    %c0 = arith.constant 0 : index
    %c0_0 = arith.constant 0 : index
    %0 = vector.load %arg2[%c0, %c0_0] : memref<8x16xf32, #tpu.memory_space<vmem>>, vector<8x13xf32>
    %c0_1 = arith.constant 0 : index
    %c0_2 = arith.constant 0 : index
    %1 = vector.load %arg3[%c0_1, %c0_2] : memref<8x13xf32, #tpu.memory_space<vmem>>, vector<8x13xf32>
    tpu.vector_store %arg3[%c0_1, %c0_2], %0 {strides = array<i32>} : memref<8x13xf32, #tpu.memory_space<vmem>>, vector<8x13xf32>,
    return
  }
  func.func @transform_0(%arg0: i32, %arg1: i32) -> (i32, i32) {
    %c0_i32 = arith.constant 0 : i32
    return %arg0, %arg1 : i32, i32
  }
  func.func @transform_1(%arg0: i32, %arg1: i32) -> (i32, i32) {
    %c0_i32 = arith.constant 0 : i32
    return %arg0, %arg1 : i32, i32
  }
}

</mosaic_0001>

<llo_original>
// kernel: tpu_custom_call.1
$region0: #{tpu_custom_call.1}
  #allocation0 [shape = 'u32[]', space=smem, size = 0x4, offset = 0x4, fixed_abs, tag = 'smem constant byte address 0x4 - core index']
  #allocation1 [shape = 'u32[72,128]{1,0:T(1,128)}', space=vmem, size = 0x9000, scoped, tag = 'internal scratch']
  %s0 = inlined_call_operand.hbm [shape: f32[8,16], index: 0, kind: input, shape index: {}]
  %s1 = inlined_call_operand.hbm [shape: f32[8,13], index: 1, kind: output, shape index: {}]
  %s2 = sld [smem:[#allocation0]]
  $region18: #{tpu_custom_call.1} parent=0
    _
  %s4 = ssub.s32 1, %s2
  %s5 = scalar_select 0, %s4, %s2
  $region1: #{tpu_custom_call.1} parent=0
    #allocation2 [shape = 'u8[4096]{0}', space=vmem, size = 0x1000, scoped, tag = 'input window, operand 0, single buffered']
    #allocation3 [shape = 's32[1]{0}', space=sflag, size = 0x4, scoped, tag = 'scoped memory for tpu_custom_call.1']
    #allocation4 [shape = 's32[1]{0}', space=sflag, size = 0x4, scoped, tag = 'scoped memory for tpu_custom_call.1']
    #allocation5 [shape = 'u8[4096]{0}', space=vmem, size = 0x1000, scoped, tag = 'output window, operand 0, single buffered']
    %6 = vsyncpa [#allocation3], 0
    %7 = vsyncpa [#allocation4], 0
    // Predicated region
    $region2: #{tpu_custom_call.1} parent=1 // pred_check
      _
    $region3: #{tpu_custom_call.1} parent=1 // pred_check_branch
      %9 = sbr.rel (0) target = $region5
    $region4: #{tpu_custom_call.1} parent=1 // pred_region
      %11 = vsyncadd [#allocation3], 0
      %s13 = sshll.u32 %s0, 4
      %s14 = int_to_ptr.hbm [resolvable:$true] %s13
      %s15 = sshll.u32 [#allocation2], 4
      %s16 = int_to_ptr.vmem [resolvable:$true] %s15
      %18 = dma.hbm_to_vmem [thread:$0]  %s14, 128, %s16, [#allocation3]
    $region5: #{tpu_custom_call.1} parent=1 // pred_fallthru
      _
    // Predicated region
    $region6: #{tpu_custom_call.1} parent=1 // pred_check
      _
    $region7: #{tpu_custom_call.1} parent=1 // pred_check_branch
      %20 = sbr.rel (0) target = $region9
    $region8: #{tpu_custom_call.1} parent=1 // pred_region
      %22 = dma.done [#allocation3], 128
    $region9: #{tpu_custom_call.1} parent=1 // pred_fallthru
      _
    %v23 = vld [vmem:[#allocation2] sm:$0xff]
    %vm24 = vcmask 105472
    %25 = vst.msk [vmem:[#allocation5] sm:$0xff] %vm24, %v23
    // Predicated region
    $region10: #{tpu_custom_call.1} parent=1 // pred_check
      _
    $region11: #{tpu_custom_call.1} parent=1 // pred_check_branch
      %27 = sbr.rel (0) target = $region13
    $region12: #{tpu_custom_call.1} parent=1 // pred_region
      %29 = vsyncadd [#allocation4], 0
      %s31 = sshll.u32 [#allocation5], 4
      %s32 = int_to_ptr.vmem [resolvable:$true] %s31
      %s33 = sshll.u32 %s1, 4
      %s34 = int_to_ptr.hbm [resolvable:$true] %s33
      %36 = dma.vmem_to_hbm [thread:$0]  %s32, 128, %s34, [#allocation4]
    $region13: #{tpu_custom_call.1} parent=1 // pred_fallthru
      _
    // Predicated region
    $region14: #{tpu_custom_call.1} parent=1 // pred_check
      _
    $region15: #{tpu_custom_call.1} parent=1 // pred_check_branch
      %38 = sbr.rel (0) target = $region17
    $region16: #{tpu_custom_call.1} parent=1 // pred_region
      %40 = dma.done [#allocation4], 128
    $region17: #{tpu_custom_call.1} parent=1 // pred_fallthru
      _
    %41 = vsyncpa [#allocation3], 1
    %42 = vsyncpa [#allocation4], 1

</llo_original>
